<compile_context>
chip_gen: v7x
topology: tpu7x:2x2x1
jax: 0.10.0
libtpu: 0.0.40
codegen_flags: <defaults>
</compile_context>

<pallas_src>
from functools import partial

import jax
import jax.numpy as jnp
from jax.experimental import pallas as pl
from jax.experimental.pallas import tpu as pltpu

SURVIVAL_DISTRIBUTION_CONFIGS = {
    'ggd': (3, [1, 1, 1]), 'gamma': (2, [1, 1]), 'exponential': (1, [1]),
    'lnormal': (2, [1, 1]), 'weibull': (2, [1, 1]), 'rayleigh': (1, [1]),
}


def _mlp_delta_kernel(base_ref, stat_ref, w1_ref, b1_ref, w2_ref, b2_ref,
                      w3_ref, b3_ref, o_ref, cat_ref):
    """Fused embedding MLP on a (features, bm) batch tile (batch on lanes).

    base_ref : (Db, bm)    baseline covariates (batch_covs[:, 0, 1:]^T)
    stat_ref : (Ds, bm)    static covariates (NaN -> -1 handled here)
    w1_ref   : (H, Db+Ds)  full first-layer weight (PyTorch (out, in) layout)
    b1_ref   : (H, 1), w2_ref: (E, H), b2_ref: (E, 1), w3_ref: (E, 1)
    b3_ref   : (1, 1)      scalar bias in SMEM
    o_ref    : (1, bm)     exp(-z), lane-dense
    cat_ref  : (Db+Ds, bm) VMEM scratch = concat([baseline, static]) tile
    """
    Db = base_ref.shape[0]
    Ds = stat_ref.shape[0]

    # Stage the concatenated input tile in VMEM scratch (never touches HBM).
    cat_ref[pl.ds(0, Db), :] = base_ref[...]
    stat = stat_ref[...]
    cat_ref[pl.ds(Db, Ds), :] = jnp.where(jnp.isnan(stat),
                                          jnp.float32(-1.0), stat)

    # Layer 1: single K=(Db+Ds) dot instead of two separately padded dots.
    h1 = jnp.dot(w1_ref[...], cat_ref[...],
                 preferred_element_type=jnp.float32) + b1_ref[...]
    h1 = jnp.maximum(h1, 0.0)

    # Layer 2.
    h2 = jnp.dot(w2_ref[...], h1,
                 preferred_element_type=jnp.float32) + b2_ref[...]
    h2 = jnp.maximum(h2, 0.0)

    # Final E -> 1 layer as VPU multiply + sublane reduce (no M=1 matmul).
    z = jnp.sum(h2 * w3_ref[...], axis=0, keepdims=True) + b3_ref[0, 0]
    # NOTE: exp(-z) can overflow to +inf for very negative z, exactly as in
    # the PyTorch reference.
    o_ref[...] = jnp.exp(-z)


def _pad_and_tile(B, cap=8192):
    """Pad batch to a multiple of 256 and pick a lane tile bm that:
       * is a multiple of 128 and divides the padded batch,
       * is <= cap (keeps per-step VMEM small on v7x/v5e),
       * is <= Bp // 2 so the parallel grid has >= 2 steps (v7x megacore)."""
    Bp = ((B + 255) // 256) * 256
    target = min(cap, Bp // 2)
    bm = max(128, (target // 128) * 128)
    while Bp % bm:
        bm -= 128
    return Bp, bm


def pred_deltas_pallas(base_T, stat_T, w1, b1, w2, b2, w3_col, b3, *, bm):
    """base_T: (Db, Bp), stat_T: (Ds, Bp) -> exp(-z) as (1, Bp)."""
    Db, Bp = base_T.shape
    Ds = stat_T.shape[0]
    H, Dtot = w1.shape
    E = w2.shape[0]
    assert Dtot == Db + Ds
    assert Bp % bm == 0
    grid = (Bp // bm,)

    return pl.pallas_call(
        _mlp_delta_kernel,
        out_shape=jax.ShapeDtypeStruct((1, Bp), jnp.float32),
        grid_spec=pltpu.PrefetchScalarGridSpec(
            num_scalar_prefetch=0,
            grid=grid,
            in_specs=[
                pl.BlockSpec((Db, bm), lambda i: (0, i)),   # baseline tile
                pl.BlockSpec((Ds, bm), lambda i: (0, i)),   # static tile
                pl.BlockSpec((H, Dtot), lambda i: (0, 0)),  # W1 (resident)
                pl.BlockSpec((H, 1), lambda i: (0, 0)),     # b1
                pl.BlockSpec((E, H), lambda i: (0, 0)),     # W2
                pl.BlockSpec((E, 1), lambda i: (0, 0)),     # b2
                pl.BlockSpec((E, 1), lambda i: (0, 0)),     # w3 (column)
                pl.BlockSpec(memory_space=pltpu.MemorySpace.SMEM),  # b3 scalar
            ],
            out_specs=pl.BlockSpec((1, bm), lambda i: (0, i)),  # lane-dense
            scratch_shapes=[pltpu.VMEM((Dtot, bm), jnp.float32)],
        ),
        compiler_params=pltpu.CompilerParams(
            dimension_semantics=("parallel",)),
    )(base_T, stat_T, w1, b1, w2, b2, w3_col, b3)


@jax.jit
def _forward_deltas(batch_covs, static_covs, w1, b1, w2, b2, w3_col, b3):
    """Single jitted program: slice + transpose + pad + kernel + unpad."""
    B = batch_covs.shape[0]
    # Baseline covariates: first time-step, drop the leading (time) column.
    # Present both covariate blocks feature-major (batch on the lane axis).
    baseline_T = jnp.transpose(batch_covs[:, 0, 1:], (1, 0)).astype(jnp.float32)
    static_T = jnp.transpose(static_covs, (1, 0)).astype(jnp.float32)

    Bp, bm = _pad_and_tile(B)
    if Bp != B:
        baseline_T = jnp.pad(baseline_T, ((0, 0), (0, Bp - B)))
        static_T = jnp.pad(static_T, ((0, 0), (0, Bp - B)))

    out = pred_deltas_pallas(baseline_T, static_T, w1, b1, w2, b2,
                             w3_col, b3, bm=bm)
    # Un-pad and present as (B, 1); staying inside the jit lets XLA fold the
    # relayout with any downstream consumer.
    return out[:, :B].reshape(B, 1)


def init_linear(key, fan_in, fan_out):
    """nn.Linear-style uniform init. Weight in PyTorch (out, in) layout,
    bias as a (out, 1) column (broadcasts over the lane/batch axis)."""
    kw, kb = jax.random.split(key)
    bound = 1.0 / (fan_in ** 0.5)
    w = jax.random.uniform(kw, (fan_out, fan_in), minval=-bound, maxval=bound,
                           dtype=jnp.float32)
    b = jax.random.uniform(kb, (fan_out, 1), minval=-bound, maxval=bound,
                           dtype=jnp.float32)
    return w, b


class EmbeddingConstantDeltaModelLinearRegressionPallas:
    def __init__(self, model_params, distribution_type, key):
        self.params = model_params
        self.distribution_type = distribution_type
        self.dyn_dim = int(2 * model_params['dynamic_cov_dim'])
        self.stat_dim = int(model_params['static_cov_dim'])
        total_cov_dim = self.dyn_dim + self.stat_dim
        H = model_params['embed_hidden_dim']
        E = model_params['embed_output_dim']

        k1, k2, k3, k4 = jax.random.split(key, 4)
        self.w1, self.b1 = init_linear(k1, total_cov_dim, H)     # (H, Dtot)
        self.w2, self.b2 = init_linear(k2, H, E)                 # (E, H), (E, 1)
        w3, self.b3 = init_linear(k3, E, 1)                      # (1, E), (1, 1)
        self.w3_col = jnp.transpose(w3)                          # (E, 1)

        n_global = SURVIVAL_DISTRIBUTION_CONFIGS[distribution_type][0]
        self.global_param_logspace = jax.random.uniform(
            k4, (n_global,), dtype=jnp.float32)
        self.deltas_fixed_to_zero = False

    def forward(self, batch_covs, static_covs):
        # TODO(synk): the PyTorch module pulls batch_covs out of a `batch`
        # object (get_unpacked_padded_cov_trajs) and prints debug info; here
        # the arrays are passed directly and prints are dropped.
        B = batch_covs.shape[0]
        if not self.deltas_fixed_to_zero:
            pred_deltas = _forward_deltas(
                batch_covs, static_covs, self.w1, self.b1,
                self.w2, self.b2, self.w3_col, self.b3)
        else:
            pred_deltas = jnp.zeros((B, 1), jnp.float32)

        hidden_states = jnp.zeros((B,), jnp.float32)
        next_step_cov_preds = jnp.asarray(B, jnp.int32)
        return pred_deltas, hidden_states, next_step_cov_preds

    def get_global_param(self):
        return jnp.exp(-self.global_param_logspace)

    def fix_deltas_to_zero(self):
        self.deltas_fixed_to_zero = True

    def unfix_deltas_to_zero(self):
        self.deltas_fixed_to_zero = False


def _reference_forward(model, batch_covs, static_covs):
    """Pure-JAX reference matching the PyTorch forward."""
    baseline = batch_covs[:, 0, 1:]
    stat = jnp.where(jnp.isnan(static_covs), jnp.float32(-1.0), static_covs)
    all_data = jnp.concatenate([baseline, stat], axis=1)
    h1 = jnp.maximum(all_data @ model.w1.T + model.b1[:, 0], 0.0)
    h2 = jnp.maximum(h1 @ model.w2.T + model.b2[:, 0], 0.0)
    z = h2 @ model.w3_col + model.b3[0, 0]
    return jnp.exp(-z)


def _run_case(model, key, B, T, model_params):
    k_dyn, k_stat, k_nan = jax.random.split(key, 3)
    F = 2 * model_params['dynamic_cov_dim'] + 1   # time column + 2*dyn covs
    batch_covs = jax.random.normal(k_dyn, (B, T, F), dtype=jnp.float32)
    static_covs = jax.random.normal(
        k_stat, (B, model_params['static_cov_dim']), dtype=jnp.float32)
    # Inject NaNs into static covs to exercise the in-kernel NaN -> -1 path.
    nan_mask = jax.random.bernoulli(k_nan, 0.2, static_covs.shape)
    static_covs = jnp.where(nan_mask, jnp.float32(jnp.nan), static_covs)

    pred_deltas, hidden_states, next_step_cov_preds = model.forward(
        batch_covs, static_covs)
    jax.block_until_ready(pred_deltas)
    jax.block_until_ready(hidden_states)
    jax.block_until_ready(next_step_cov_preds)

    assert pred_deltas.shape == (B, 1)
    assert hidden_states.shape == (B,)
    assert bool(jnp.all(jnp.isfinite(pred_deltas)))

    ref = _reference_forward(model, batch_covs, static_covs)
    assert bool(jnp.allclose(pred_deltas, ref, rtol=1e-5, atol=1e-5)), \
        f"Pallas output does not match JAX reference (B={B})"


if __name__ == "__main__":
    key = jax.random.PRNGKey(0)
    k_model, k_case1, k_case2 = jax.random.split(key, 3)

    model_params = {
        'dynamic_cov_dim': 4,
        'static_cov_dim': 3,
        'embed_hidden_dim': 32,
        'embed_output_dim': 16,
    }
    model = EmbeddingConstantDeltaModelLinearRegressionPallas(
        model_params, 'ggd', k_model)

    # Small batch (exercises padding B=8 -> 256, grid of 2 tiles).
    _run_case(model, k_case1, B=8, T=8, model_params=model_params)
    # Awkward batch size (exercises pad-to-256-multiple + unpad path).
    _run_case(model, k_case2, B=300, T=8, model_params=model_params)

    print("KERNEL_OK")
</pallas_src>

<mosaic_0001>
module attributes {stable_mosaic.version = 11 : i64} {
  func.func @_mlp_delta_kernel(%arg0: i32, %arg1: memref<8x128xf32, #tpu.memory_space<vmem>>, %arg2: memref<3x128xf32, #tpu.memory_space<vmem>>, %arg3: memref<32x11xf32, #tpu.memory_space<vmem>>, %arg4: memref<32x1xf32, #tpu.memory_space<vmem>>, %arg5: memref<16x32xf32, #tpu.memory_space<vmem>>, %arg6: memref<16x1xf32, #tpu.memory_space<vmem>>, %arg7: memref<16x1xf32, #tpu.memory_space<vmem>>, %arg8: memref<1x1xf32, #tpu.memory_space<smem>>, %arg9: memref<1x128xf32, #tpu.memory_space<vmem>>, %arg10: memref<11x128xf32, #tpu.memory_space<vmem>>) attributes {dimension_semantics = [#tpu.dimension_semantics<parallel>], iteration_bounds = array<i64: 2>, scalar_prefetch = 0 : i64, scratch_operands = 1 : i64, tpu.core_type = #tpu.core_type<tc>, window_params = [{transform_indices = @transform_0, window_bounds = array<i64: 8, 128>}, {transform_indices = @transform_1, window_bounds = array<i64: 3, 128>}, {pipeline_mode = #tpu.pipeline_mode<synchronous>, transform_indices = @transform_2, window_bounds = array<i64: 32, 11>}, {pipeline_mode = #tpu.pipeline_mode<synchronous>, transform_indices = @transform_3, window_bounds = array<i64: 32, 1>}, {pipeline_mode = #tpu.pipeline_mode<synchronous>, transform_indices = @transform_4, window_bounds = array<i64: 16, 32>}, {pipeline_mode = #tpu.pipeline_mode<synchronous>, transform_indices = @transform_5, window_bounds = array<i64: 16, 1>}, {pipeline_mode = #tpu.pipeline_mode<synchronous>, transform_indices = @transform_6, window_bounds = array<i64: 16, 1>}, {transform_indices = @transform_7, window_bounds = array<i64: 1, 1>}, {transform_indices = @transform_8, window_bounds = array<i64: 1, 128>}]} {
    %c0 = arith.constant 0 : index
    %c0_0 = arith.constant 0 : index
    %0 = vector.load %arg1[%c0, %c0_0] : memref<8x128xf32, #tpu.memory_space<vmem>>, vector<8x128xf32>
    %c0_1 = arith.constant 0 : index
    %c0_2 = arith.constant 0 : index
    %1 = vector.load %arg10[%c0_1, %c0_2] : memref<11x128xf32, #tpu.memory_space<vmem>>, vector<8x128xf32>
    tpu.vector_store %arg10[%c0_1, %c0_2], %0 {strides = array<i32>} : memref<11x128xf32, #tpu.memory_space<vmem>>, vector<8x128xf32>,
    %c0_3 = arith.constant 0 : index
    %c0_4 = arith.constant 0 : index
    %2 = vector.load %arg2[%c0_3, %c0_4] : memref<3x128xf32, #tpu.memory_space<vmem>>, vector<3x128xf32>
    %3 = arith.cmpf one, %2, %2 : vector<3x128xf32>
    %cst = arith.constant -1.000000e+00 : f32
    %4 = vector.broadcast %cst : f32 to vector<3x128xf32>
    %5 = arith.select %3, %4, %2 : vector<3x128xi1>, vector<3x128xf32>
    %c8 = arith.constant 8 : index
    %c0_5 = arith.constant 0 : index
    %6 = vector.load %arg10[%c8, %c0_5] : memref<11x128xf32, #tpu.memory_space<vmem>>, vector<3x128xf32>
    tpu.vector_store %arg10[%c8, %c0_5], %5 {strides = array<i32>} : memref<11x128xf32, #tpu.memory_space<vmem>>, vector<3x128xf32>,
    %c0_6 = arith.constant 0 : index
    %c0_7 = arith.constant 0 : index
    %7 = vector.load %arg3[%c0_6, %c0_7] : memref<32x11xf32, #tpu.memory_space<vmem>>, vector<32x11xf32>
    %c0_8 = arith.constant 0 : index
    %c0_9 = arith.constant 0 : index
    %8 = vector.load %arg10[%c0_8, %c0_9] : memref<11x128xf32, #tpu.memory_space<vmem>>, vector<11x128xf32>
    %cst_10 = arith.constant dense<0.000000e+00> : vector<32x128xf32>
    %9 = tpu.matmul %7, %8, %cst_10 {dimension_numbers = #tpu.dot_dimension_numbers<[1], [0], [0], [1], [0, 0, 1, 1], [], []>} : vector<32x11xf32>, vector<11x128xf32>, vector<32x128xf32> -> vector<32x128xf32>
    %c0_11 = arith.constant 0 : index
    %c0_12 = arith.constant 0 : index
    %10 = vector.load %arg4[%c0_11, %c0_12] : memref<32x1xf32, #tpu.memory_space<vmem>>, vector<32x1xf32>
    %11 = vector.broadcast %10 : vector<32x1xf32> to vector<32x128xf32>
    %12 = arith.addf %9, %11 : vector<32x128xf32>
    %cst_13 = arith.constant 0.000000e+00 : f32
    %13 = vector.broadcast %cst_13 : f32 to vector<32x128xf32>
    %14 = arith.maximumf %12, %13 : vector<32x128xf32>
    %c0_14 = arith.constant 0 : index
    %c0_15 = arith.constant 0 : index
    %15 = vector.load %arg5[%c0_14, %c0_15] : memref<16x32xf32, #tpu.memory_space<vmem>>, vector<16x32xf32>
    %cst_16 = arith.constant dense<0.000000e+00> : vector<16x128xf32>
    %16 = tpu.matmul %15, %14, %cst_16 {dimension_numbers = #tpu.dot_dimension_numbers<[1], [0], [0], [1], [0, 0, 1, 1], [], []>} : vector<16x32xf32>, vector<32x128xf32>, vector<16x128xf32> -> vector<16x128xf32>
    %c0_17 = arith.constant 0 : index
    %c0_18 = arith.constant 0 : index
    %17 = vector.load %arg6[%c0_17, %c0_18] : memref<16x1xf32, #tpu.memory_space<vmem>>, vector<16x1xf32>
    %18 = vector.broadcast %17 : vector<16x1xf32> to vector<16x128xf32>
    %19 = arith.addf %16, %18 : vector<16x128xf32>
    %cst_19 = arith.constant 0.000000e+00 : f32
    %20 = vector.broadcast %cst_19 : f32 to vector<16x128xf32>
    %21 = arith.maximumf %19, %20 : vector<16x128xf32>
    %c0_20 = arith.constant 0 : index
    %c0_21 = arith.constant 0 : index
    %22 = vector.load %arg7[%c0_20, %c0_21] : memref<16x1xf32, #tpu.memory_space<vmem>>, vector<16x1xf32>
    %23 = vector.broadcast %22 : vector<16x1xf32> to vector<16x128xf32>
    %24 = arith.mulf %21, %23 : vector<16x128xf32>
    %cst_22 = arith.constant dense<0.000000e+00> : vector<128xf32>
    %25 = vector.multi_reduction <add>, %24, %cst_22 [0] : vector<16x128xf32> to vector<128xf32>
    %26 = vector.shape_cast %25 : vector<128xf32> to vector<1x128xf32>
    %c0_23 = arith.constant 0 : index
    %c0_24 = arith.constant 0 : index
    %27 = memref.load %arg8[%c0_23, %c0_24] : memref<1x1xf32, #tpu.memory_space<smem>>
    %28 = vector.broadcast %27 : f32 to vector<1x128xf32>
    %29 = arith.addf %26, %28 : vector<1x128xf32>
    %cst_25 = arith.constant 0.000000e+00 : f32
    %30 = vector.broadcast %cst_25 : f32 to vector<1x128xf32>
    %31 = arith.subf %30, %29 : vector<1x128xf32>
    %32 = math.exp %31 : vector<1x128xf32>
    %c0_26 = arith.constant 0 : index
    %c0_27 = arith.constant 0 : index
    %33 = vector.load %arg9[%c0_26, %c0_27] : memref<1x128xf32, #tpu.memory_space<vmem>>, vector<1x128xf32>
    tpu.vector_store %arg9[%c0_26, %c0_27], %32 {strides = array<i32>} : memref<1x128xf32, #tpu.memory_space<vmem>>, vector<1x128xf32>,
    return
  }
  func.func @transform_0(%arg0: i32) -> (i32, i32) {
    %c0_i32 = arith.constant 0 : i32
    %c0_i32_0 = arith.constant 0 : i32
    return %c0_i32, %arg0 : i32, i32
  }
  func.func @transform_1(%arg0: i32) -> (i32, i32) {
    %c0_i32 = arith.constant 0 : i32
    %c0_i32_0 = arith.constant 0 : i32
    return %c0_i32, %arg0 : i32, i32
  }
  func.func @transform_2(%arg0: i32) -> (i32, i32) {
    %c0_i32 = arith.constant 0 : i32
    %c0_i32_0 = arith.constant 0 : i32
    %c0_i32_1 = arith.constant 0 : i32
    return %c0_i32, %c0_i32_0 : i32, i32
  }
  func.func @transform_3(%arg0: i32) -> (i32, i32) {
    %c0_i32 = arith.constant 0 : i32
    %c0_i32_0 = arith.constant 0 : i32
    %c0_i32_1 = arith.constant 0 : i32
    return %c0_i32, %c0_i32_0 : i32, i32
  }
  func.func @transform_4(%arg0: i32) -> (i32, i32) {
    %c0_i32 = arith.constant 0 : i32
    %c0_i32_0 = arith.constant 0 : i32
    %c0_i32_1 = arith.constant 0 : i32
    return %c0_i32, %c0_i32_0 : i32, i32
  }
  func.func @transform_5(%arg0: i32) -> (i32, i32) {
    %c0_i32 = arith.constant 0 : i32
    %c0_i32_0 = arith.constant 0 : i32
    %c0_i32_1 = arith.constant 0 : i32
    return %c0_i32, %c0_i32_0 : i32, i32
  }
  func.func @transform_6(%arg0: i32) -> (i32, i32) {
    %c0_i32 = arith.constant 0 : i32
    %c0_i32_0 = arith.constant 0 : i32
    %c0_i32_1 = arith.constant 0 : i32
    return %c0_i32, %c0_i32_0 : i32, i32
  }
  func.func @transform_7(%arg0: i32) -> (i32, i32) {
    %c0_i32 = arith.constant 0 : i32
    %c0_i32_0 = arith.constant 0 : i32
    %c0_i32_1 = arith.constant 0 : i32
    return %c0_i32, %c0_i32_0 : i32, i32
  }
  func.func @transform_8(%arg0: i32) -> (i32, i32) {
    %c0_i32 = arith.constant 0 : i32
    %c0_i32_0 = arith.constant 0 : i32
    return %c0_i32, %arg0 : i32, i32
  }
}

</mosaic_0001>

<llo_original>
// kernel: _forward_deltas.1
$region0: #{_forward_deltas.1}
  #allocation0 [shape = 'u32[]', space=smem, size = 0x4, offset = 0x4, fixed_abs, tag = 'smem constant byte address 0x4 - core index']
  #allocation1 [shape = 'u32[144,128]{1,0:T(1,128)}', space=vmem, size = 0x12000, scoped, tag = 'internal scratch']
  #allocation2 [shape = 'f32[11,128]{1,0:T(8,128)}', space=vmem, size = 0x2000, scoped, tag = 'scratch operand']
  #allocation3 [shape = 'f32[1,1]{1,0:T(1,128)S(6)}', space=smem, size = 0x200, scoped, tag = 'scoped memory for _forward_deltas.1']
  %s0 = inlined_call_operand.vmem [shape: f32[8,256], index: 0, kind: input, shape index: {}]
  %s1 = inlined_call_operand.vmem [shape: f32[3,256], index: 1, kind: input, shape index: {}]
  %s2 = inlined_call_operand.vmem [shape: f32[32,11], index: 2, kind: input, shape index: {}]
  %s3 = inlined_call_operand.vmem [shape: f32[32,1], index: 3, kind: input, shape index: {}]
  %s4 = inlined_call_operand.vmem [shape: f32[16,32], index: 4, kind: input, shape index: {}]
  %s5 = inlined_call_operand.vmem [shape: f32[16,1], index: 5, kind: input, shape index: {}]
  %s6 = inlined_call_operand.vmem [shape: f32[16,1], index: 6, kind: input, shape index: {}]
  %s7 = inlined_call_operand.<no memory space> [shape: f32[1,1], index: 7, kind: input, shape index: {}]
  %s8 = inlined_call_operand.vmem [shape: f32[1,256], index: 8, kind: output, shape index: {}]
  %s9 = sld [smem:[#allocation0]]
  $region65: #{_forward_deltas.1} parent=0
    _
  %s11 = ssub.s32 1, %s9
  %s12 = scalar_select 0, %s11, %s9
  %13 = sst [smem:[#allocation3]] %s7
  loop: start=0, step=1, limit=4
  $region2: #{_forward_deltas.1} parent=0 // loop_pre_header
    _
  $region3: #{_forward_deltas.1} parent=0 // loop_header
    %s15 = sphi 0, %s19
    %p16 = scmp.ge.s32.totalorder %s15, 4
    %s25 = sphi 0, %s27
    %s28 = sphi 0, %s25
    %s29 = sphi 0, %s28
    %s45 = sphi 0, %s29
    %s51 = sphi 0, %s53
    %s54 = sphi 0, %s51
    %s55 = sphi 0, %s54
    %s71 = sphi 0, %s55
    %s75 = sphi 0, %s75
    %s77 = sphi 0, %s75
    %s78 = sphi 0, %s77
    %s92 = sphi 0, %s78
    %s96 = sphi 0, %s96
    %s98 = sphi 0, %s96
    %s99 = sphi 0, %s98
    %s113 = sphi 0, %s99
    %s117 = sphi 0, %s117
    %s119 = sphi 0, %s117
    %s120 = sphi 0, %s119
    %s134 = sphi 0, %s120
    %s138 = sphi 0, %s138
    %s140 = sphi 0, %s138
    %s141 = sphi 0, %s140
    %s155 = sphi 0, %s141
    %s159 = sphi 0, %s159
    %s161 = sphi 0, %s159
    %s162 = sphi 0, %s161
    %s176 = sphi 0, %s162
    %s180 = sphi 0, %s180
    %s182 = sphi 0, %s180
    %s183 = sphi 0, %s182
    %s197 = sphi 0, %s183
    %s203 = sphi 0, %s205
    %s206 = sphi 0, %s203
    %s207 = sphi 0, %s206
    %s223 = sphi 0, %s207
  $region4: #{_forward_deltas.1} parent=0 // loop_header_branch
    %18 = sbr.rel (%p16) target = $region8
  $region5: #{_forward_deltas.1} parent=0 // loop_body
    %s20 = ssub.s32 %s15, 1
    %s21 = ssub.s32 %s15, 2
    %s22 = sadd.s32 %s15, 1
    %s23 = ssub.s32 %s15, %s22
    %p24 = scmp.eq.s32.totalorder %s23, 0
    %s26 = sadd.s32 %s25, 1
    %s27 = scalar_select %p24, %s25, %s26
    %p30 = pneg %p24
    %p31 = scmp.eq.s32.totalorder %s15, 1
    %p32 = por %p30, %p31
    %p33 = scmp.ne.s32.totalorder %s25, %s28
    %p34 = scmp.eq.s32.totalorder %s15, 0
    %p35 = por %p33, %p34
    %p36 = scmp.ne.s32.totalorder %s25, %s28
    %p37 = scmp.eq.s32.totalorder %s20, 1
    %p38 = por %p36, %p37
    %p39 = scmp.ne.s32.totalorder %s28, %s29
    %p40 = scmp.eq.s32.totalorder %s20, 0
    %p41 = por %p39, %p40
    %p42 = scmp.ne.s32.totalorder %s28, %s29
    %p43 = scmp.eq.s32.totalorder %s21, 1
    %p44 = por %p42, %p43
    %p46 = scmp.ne.s32.totalorder %s29, %s45
    %p47 = scmp.eq.s32.totalorder %s21, 0
    %p48 = por %p46, %p47
    %s49 = ssub.s32 %s15, %s22
    %p50 = scmp.eq.s32.totalorder %s49, 0
    %s52 = sadd.s32 %s51, 1
    %s53 = scalar_select %p50, %s51, %s52
    %p56 = pneg %p50
    %p57 = scmp.eq.s32.totalorder %s15, 1
    %p58 = por %p56, %p57
    %p59 = scmp.ne.s32.totalorder %s51, %s54
    %p60 = scmp.eq.s32.totalorder %s15, 0
    %p61 = por %p59, %p60
    %p62 = scmp.ne.s32.totalorder %s51, %s54
    %p63 = scmp.eq.s32.totalorder %s20, 1
    %p64 = por %p62, %p63
    %p65 = scmp.ne.s32.totalorder %s54, %s55
    %p66 = scmp.eq.s32.totalorder %s20, 0
    %p67 = por %p65, %p66
    %p68 = scmp.ne.s32.totalorder %s54, %s55
    %p69 = scmp.eq.s32.totalorder %s21, 1
    %p70 = por %p68, %p69
    %p72 = scmp.ne.s32.totalorder %s55, %s71
    %p73 = scmp.eq.s32.totalorder %s21, 0
    %p74 = por %p72, %p73
    %s76 = sadd.s32 %s75, 1
    %p79 = scmp.eq.s32.totalorder %s15, 1
    %p80 = scmp.ne.s32.totalorder %s75, %s77
    %p81 = scmp.eq.s32.totalorder %s15, 0
    %p82 = por %p80, %p81
    %p83 = scmp.ne.s32.totalorder %s75, %s77
    %p84 = scmp.eq.s32.totalorder %s20, 1
    %p85 = por %p83, %p84
    %p86 = scmp.ne.s32.totalorder %s77, %s78
    %p87 = scmp.eq.s32.totalorder %s20, 0
    %p88 = por %p86, %p87
    %p89 = scmp.ne.s32.totalorder %s77, %s78
    %p90 = scmp.eq.s32.totalorder %s21, 1
    %p91 = por %p89, %p90
    %p93 = scmp.ne.s32.totalorder %s78, %s92
    %p94 = scmp.eq.s32.totalorder %s21, 0
    %p95 = por %p93, %p94
    %s97 = sadd.s32 %s96, 1
    %p100 = scmp.eq.s32.totalorder %s15, 1
    %p101 = scmp.ne.s32.totalorder %s96, %s98
    %p102 = scmp.eq.s32.totalorder %s15, 0
    %p103 = por %p101, %p102
    %p104 = scmp.ne.s32.totalorder %s96, %s98
    %p105 = scmp.eq.s32.totalorder %s20, 1
    %p106 = por %p104, %p105
    %p107 = scmp.ne.s32.totalorder %s98, %s99
    %p108 = scmp.eq.s32.totalorder %s20, 0
    %p109 = por %p107, %p108
    %p110 = scmp.ne.s32.totalorder %s98, %s99
    %p111 = scmp.eq.s32.totalorder %s21, 1
    %p112 = por %p110, %p111
    %p114 = scmp.ne.s32.totalorder %s99, %s113
    %p115 = scmp.eq.s32.totalorder %s21, 0
    %p116 = por %p114, %p115
    %s118 = sadd.s32 %s117, 1
    %p121 = scmp.eq.s32.totalorder %s15, 1
    %p122 = scmp.ne.s32.totalorder %s117, %s119
    %p123 = scmp.eq.s32.totalorder %s15, 0
    %p124 = por %p122, %p123
    %p125 = scmp.ne.s32.totalorder %s117, %s119
    %p126 = scmp.eq.s32.totalorder %s20, 1
    %p127 = por %p125, %p126
    %p128 = scmp.ne.s32.totalorder %s119, %s120
    %p129 = scmp.eq.s32.totalorder %s20, 0
    %p130 = por %p128, %p129
    %p131 = scmp.ne.s32.totalorder %s119, %s120
    %p132 = scmp.eq.s32.totalorder %s21, 1
    %p133 = por %p131, %p132
    %p135 = scmp.ne.s32.totalorder %s120, %s134
    %p136 = scmp.eq.s32.totalorder %s21, 0
    %p137 = por %p135, %p136
    %s139 = sadd.s32 %s138, 1
    %p142 = scmp.eq.s32.totalorder %s15, 1
    %p143 = scmp.ne.s32.totalorder %s138, %s140
    %p144 = scmp.eq.s32.totalorder %s15, 0
    %p145 = por %p143, %p144
    %p146 = scmp.ne.s32.totalorder %s138, %s140
    %p147 = scmp.eq.s32.totalorder %s20, 1
    %p148 = por %p146, %p147
    %p149 = scmp.ne.s32.totalorder %s140, %s141
    %p150 = scmp.eq.s32.totalorder %s20, 0
    %p151 = por %p149, %p150
    %p152 = scmp.ne.s32.totalorder %s140, %s141
    %p153 = scmp.eq.s32.totalorder %s21, 1
    %p154 = por %p152, %p153
    %p156 = scmp.ne.s32.totalorder %s141, %s155
    %p157 = scmp.eq.s32.totalorder %s21, 0
    %p158 = por %p156, %p157
    %s160 = sadd.s32 %s159, 1
    %p163 = scmp.eq.s32.totalorder %s15, 1
    %p164 = scmp.ne.s32.totalorder %s159, %s161
    %p165 = scmp.eq.s32.totalorder %s15, 0
    %p166 = por %p164, %p165
    %p167 = scmp.ne.s32.totalorder %s159, %s161
    %p168 = scmp.eq.s32.totalorder %s20, 1
    %p169 = por %p167, %p168
    %p170 = scmp.ne.s32.totalorder %s161, %s162
    %p171 = scmp.eq.s32.totalorder %s20, 0
    %p172 = por %p170, %p171
    %p173 = scmp.ne.s32.totalorder %s161, %s162
    %p174 = scmp.eq.s32.totalorder %s21, 1
    %p175 = por %p173, %p174
    %p177 = scmp.ne.s32.totalorder %s162, %s176
    %p178 = scmp.eq.s32.totalorder %s21, 0
    %p179 = por %p177, %p178
    %s181 = sadd.s32 %s180, 1
    %p184 = scmp.eq.s32.totalorder %s15, 1
    %p185 = scmp.ne.s32.totalorder %s180, %s182
    %p186 = scmp.eq.s32.totalorder %s15, 0
    %p187 = por %p185, %p186
    %p188 = scmp.ne.s32.totalorder %s180, %s182
    %p189 = scmp.eq.s32.totalorder %s20, 1
    %p190 = por %p188, %p189
    %p191 = scmp.ne.s32.totalorder %s182, %s183
    %p192 = scmp.eq.s32.totalorder %s20, 0
    %p193 = por %p191, %p192
    %p194 = scmp.ne.s32.totalorder %s182, %s183
    %p195 = scmp.eq.s32.totalorder %s21, 1
    %p196 = por %p194, %p195
    %p198 = scmp.ne.s32.totalorder %s183, %s197
    %p199 = scmp.eq.s32.totalorder %s21, 0
    %p200 = por %p198, %p199
    %s201 = ssub.s32 %s15, %s22
    %p202 = scmp.eq.s32.totalorder %s201, 0
    %s204 = sadd.s32 %s203, 1
    %s205 = scalar_select %p202, %s203, %s204
    %p208 = pneg %p202
    %p209 = scmp.eq.s32.totalorder %s15, 1
    %p210 = por %p208, %p209
    %p211 = scmp.ne.s32.totalorder %s203, %s206
    %p212 = scmp.eq.s32.totalorder %s15, 0
    %p213 = por %p211, %p212
    %p214 = scmp.ne.s32.totalorder %s203, %s206
    %p215 = scmp.eq.s32.totalorder %s20, 1
    %p216 = por %p214, %p215
    %p217 = scmp.ne.s32.totalorder %s206, %s207
    %p218 = scmp.eq.s32.totalorder %s20, 0
    %p219 = por %p217, %p218
    %p220 = scmp.ne.s32.totalorder %s206, %s207
    %p221 = scmp.eq.s32.totalorder %s21, 1
    %p222 = por %p220, %p221
    %p224 = scmp.ne.s32.totalorder %s207, %s223
    %p225 = scmp.eq.s32.totalorder %s21, 0
    %p226 = por %p224, %p225
    %p227 = scmp.le.s32.totalorder 1, %s15
    %p228 = scmp.lt.s32.totalorder %s15, 3
    %p229 = pnand %p227, %p228
    %p230 = pneg %p229
    // Predicated region
    $region9: #{_forward_deltas.1} parent=5 // pred_check
      _
    $region10: #{_forward_deltas.1} parent=5 // pred_check_branch
      %232 = sbr.rel (%p229) target = $region12
    $region11: #{_forward_deltas.1} parent=5 // pred_region
      %s233 = ssub.s32 %s15, 1
      // Predicated region
      $region13: #{_forward_deltas.1} parent=11 // pred_check
        %p234 = pneg %p88
      $region14: #{_forward_deltas.1} parent=11 // pred_check_branch
        %236 = sbr.rel (%p234) target = $region16
      $region15: #{_forward_deltas.1} parent=11 // pred_region
        _
      $region16: #{_forward_deltas.1} parent=11 // pred_fallthru
        _
      // Predicated region
      $region17: #{_forward_deltas.1} parent=11 // pred_check
        %p237 = pneg %p109
      $region18: #{_forward_deltas.1} parent=11 // pred_check_branch
        %239 = sbr.rel (%p237) target = $region20
      $region19: #{_forward_deltas.1} parent=11 // pred_region
        _
      $region20: #{_forward_deltas.1} parent=11 // pred_fallthru
        _
      // Predicated region
      $region21: #{_forward_deltas.1} parent=11 // pred_check
        %p240 = pneg %p130
      $region22: #{_forward_deltas.1} parent=11 // pred_check_branch
        %242 = sbr.rel (%p240) target = $region24
      $region23: #{_forward_deltas.1} parent=11 // pred_region
        _
      $region24: #{_forward_deltas.1} parent=11 // pred_fallthru
        _
      // Predicated region
      $region25: #{_forward_deltas.1} parent=11 // pred_check
        %p243 = pneg %p151
      $region26: #{_forward_deltas.1} parent=11 // pred_check_branch
        %245 = sbr.rel (%p243) target = $region28
      $region27: #{_forward_deltas.1} parent=11 // pred_region
        _
      $region28: #{_forward_deltas.1} parent=11 // pred_fallthru
        _
      // Predicated region
      $region29: #{_forward_deltas.1} parent=11 // pred_check
        %p246 = pneg %p172
      $region30: #{_forward_deltas.1} parent=11 // pred_check_branch
        %248 = sbr.rel (%p246) target = $region32
      $region31: #{_forward_deltas.1} parent=11 // pred_region
        _
      $region32: #{_forward_deltas.1} parent=11 // pred_fallthru
        _
      // Predicated region
      $region33: #{_forward_deltas.1} parent=11 // pred_check
        %p249 = pneg %p193
      $region34: #{_forward_deltas.1} parent=11 // pred_check_branch
        %251 = sbr.rel (%p249) target = $region36
      $region35: #{_forward_deltas.1} parent=11 // pred_region
        _
      $region36: #{_forward_deltas.1} parent=11 // pred_fallthru
        _
    $region12: #{_forward_deltas.1} parent=5 // pred_fallthru
      _
    %p252 = scmp.lt.s32.totalorder %s15, 2
    // Predicated region
    $region37: #{_forward_deltas.1} parent=5 // pred_check
      %p253 = pneg %p252
    $region38: #{_forward_deltas.1} parent=5 // pred_check_branch
      %255 = sbr.rel (%p253) target = $region40
    $region39: #{_forward_deltas.1} parent=5 // pred_region
      // Predicated region
      $region41: #{_forward_deltas.1} parent=39 // pred_check
        %p256 = pneg %p35
      $region42: #{_forward_deltas.1} parent=39 // pred_check_branch
        %258 = sbr.rel (%p256) target = $region44
      $region43: #{_forward_deltas.1} parent=39 // pred_region
        %p259 = scmp.lt.s32.totalorder %s15, 1
        %s260 = scalar_select %p259, %s15, 1
        %s261 = smul.addr %s260, 8
        %s262 = scalar_lea.vmem %s0, %s261
      $region44: #{_forward_deltas.1} parent=39 // pred_fallthru
        _
      // Predicated region
      $region45: #{_forward_deltas.1} parent=39 // pred_check
        %p263 = pneg %p61
      $region46: #{_forward_deltas.1} parent=39 // pred_check_branch
        %265 = sbr.rel (%p263) target = $region48
      $region47: #{_forward_deltas.1} parent=39 // pred_region
        %p266 = scmp.lt.s32.totalorder %s15, 1
        %s267 = scalar_select %p266, %s15, 1
        %s268 = smul.addr %s267, 4
        %s269 = scalar_lea.vmem %s1, %s268
      $region48: #{_forward_deltas.1} parent=39 // pred_fallthru
        _
    $region40: #{_forward_deltas.1} parent=5 // pred_fallthru
      _
    %p270 = scmp.le.s32.totalorder 1, %s15
    %p271 = scmp.lt.s32.totalorder %s15, 3
    %p272 = pnand %p270, %p271
    %p273 = pneg %p272
    // Predicated region
    $region49: #{_forward_deltas.1} parent=5 // pred_check
      _
    $region50: #{_forward_deltas.1} parent=5 // pred_check_branch
      %275 = sbr.rel (%p272) target = $region52
    $region51: #{_forward_deltas.1} parent=5 // pred_region
      %s276 = ssub.s32 %s15, 1
      %p277 = scmp.lt.s32.totalorder %s20, 1
      %s278 = scalar_select %p277, %s20, 1
      %s279 = smul.addr %s278, 8
      %s280 = scalar_lea.vmem %s0, %s279
      %p281 = pneg %p41
      %p282 = pneg %p38
      %p283 = scmp.lt.s32.totalorder %s20, 1
      %s284 = scalar_select %p283, %s20, 1
      %s285 = smul.addr %s284, 4
      %s286 = scalar_lea.vmem %s1, %s285
      %p287 = pneg %p67
      %p288 = pneg %p64
      %p289 = pneg %p88
      %p290 = pneg %p85
      %p291 = pneg %p109
      %p292 = pneg %p106
      %p293 = pneg %p130
      %p294 = pneg %p127
      %p295 = pneg %p151
      %p296 = pneg %p148
      %p297 = pneg %p172
      %p298 = pneg %p169
      %p299 = pneg %p193
      %p300 = pneg %p190
      %p301 = pneg %p219
      %p302 = pneg %p216
      %p303 = scmp.lt.s32.totalorder %s20, 1
      %s304 = scalar_select %p303, %s20, 1
      %s305 = scalar_lea.vmem %s8, %s304
      %p306 = scmp.lt.s32.totalorder %s20, 1
      %s307 = scalar_select %p306, %s20, 1
      %s308 = smul.addr %s307, 8
      %s309 = scalar_lea.vmem %s0, %s308
      %p310 = scmp.lt.s32.totalorder %s20, 1
      %s311 = scalar_select %p310, %s20, 1
      %s312 = smul.addr %s311, 4
      %s313 = scalar_lea.vmem %s1, %s312
      %p314 = scmp.lt.s32.totalorder %s20, 1
      %s315 = scalar_select %p314, %s20, 1
      %s316 = scalar_lea.vmem %s8, %s315
      %v317 = vld [vmem:[%s309] sm:$0xff]
      %318 = vst [vmem:[#allocation2] sm:$0xff] %v317
      %v319 = vld [vmem:[%s313] sm:$0x7]
      %vm320 = vcmp.ne.f32.partialorder %v319, %v319
      %v321 = vsel %vm320, -1.0, %v319
      %322 = vst [vmem:[#allocation2 + $0x8] sm:$0x7] %v321
      %v323 = vld [vmem:[%s2] sm:$0xff]
      %v324 = vld [vmem:[%s2 + $0x8] sm:$0xff]
      %v325 = vld [vmem:[%s2 + $0x10] sm:$0xff]
      %v326 = vld [vmem:[%s2 + $0x18] sm:$0xff]
      %v327 = vld [vmem:[#allocation2] sm:$0xff]
      %v328 = vld [vmem:[#allocation2 + $0x8] sm:$0x7]
      %v329 = vld [vmem:[%s3] sm:$0xff]
      %v330 = vld [vmem:[%s3 + $0x8] sm:$0xff]
      %v331 = vld [vmem:[%s3 + $0x10] sm:$0xff]
      %v332 = vld [vmem:[%s3 + $0x18] sm:$0xff]
      %334 = vset.pattern.permute.xlu0 0
      %335 = vperm.xlu0 %334, %v329
      %v336 = vpop.permute.xlu0 %335
      %339 = vset.pattern.permute.xlu0 0
      %340 = vperm.xlu0 %339, %v330
      %v341 = vpop.permute.xlu0 %340
      %344 = vset.pattern.permute.xlu0 0
      %345 = vperm.xlu0 %344, %v331
      %v346 = vpop.permute.xlu0 %345
      %349 = vset.pattern.permute.xlu0 0
      %350 = vperm.xlu0 %349, %v332
      %v351 = vpop.permute.xlu0 %350
      %vm353 = vcmask 89088
      %v355 = vsel %vm353, %v323, 0
      %v358 = vsel %vm353, %v324, 0
      %v361 = vsel %vm353, %v325, 0
      %v364 = vsel %vm353, %v326, 0
      %vm366 = vcmask 1042432
      %v368 = vsel %vm366, %v328, 0
      %370 = vmatprep.subr.mxu0 0.0
      %371 = vmatpush1.msra.mxu0 %v327
      %372 = vmatprep.subr.mxu0 0.0
      %373 = vmatpush1.msra.mxu0 %v368
      %374 = vmatprep.subr.mxu0 0.0
      %375 = vmatpush1.msra.mxu0 0.0
      %376 = vmatprep.subr.mxu0 0.0
      %377 = vmatpush1.msra.mxu0 0.0
      %378 = vmatprep.subr.mxu0 0.0
      %379 = vmatpush1.msra.mxu0 0.0
      %380 = vmatprep.subr.mxu0 0.0
      %381 = vmatpush1.msra.mxu0 0.0
      %382 = vmatprep.subr.mxu0 0.0
      %383 = vmatpush1.msra.mxu0 0.0
      %384 = vmatprep.subr.mxu0 0.0
      %385 = vmatpush1.msra.mxu0 0.0
      %386 = vmatprep.subr.mxu0 0.0
      %387 = vmatpush1.msra.mxu0 0.0
      %388 = vmatprep.subr.mxu0 0.0
      %389 = vmatpush1.msra.mxu0 0.0
      %390 = vmatprep.subr.mxu0 0.0
      %391 = vmatpush1.msra.mxu0 0.0
      %392 = vmatprep.subr.mxu0 0.0
      %393 = vmatpush1.msra.mxu0 0.0
      %394 = vmatprep.subr.mxu0 0.0
      %395 = vmatpush1.msra.mxu0 0.0
      %396 = vmatprep.subr.mxu0 0.0
      %397 = vmatpush1.msra.mxu0 0.0
      %398 = vmatprep.subr.mxu0 0.0
      %399 = vmatpush1.msra.mxu0 0.0
      %400 = vmatprep.subr.mxu0 0.0
      %401 = vmatpush1.msra.mxu0 0.0
      %402 = vmatprep.subr.mxu0 0.0
      %403 = vmatpush1.msra.mxu0 0.0
      %404 = vmatprep.subr.mxu0 0.0
      %405 = vmatpush1.msra.mxu0 0.0
      %406 = vmatprep.subr.mxu0 0.0
      %407 = vmatpush1.msra.mxu0 0.0
      %408 = vmatprep.subr.mxu0 0.0
      %409 = vmatpush1.msra.mxu0 0.0
      %410 = vmatprep.subr.mxu0 0.0
      %411 = vmatpush1.msra.mxu0 0.0
      %412 = vmatprep.subr.mxu0 0.0
      %413 = vmatpush1.msra.mxu0 0.0
      %414 = vmatprep.subr.mxu0 0.0
      %415 = vmatpush1.msra.mxu0 0.0
      %416 = vmatprep.subr.mxu0 0.0
      %417 = vmatpush1.msra.mxu0 0.0
      %418 = vmatprep.subr.mxu0 0.0
      %419 = vmatpush1.msra.mxu0 0.0
      %420 = vmatprep.subr.mxu0 0.0
      %421 = vmatpush1.msra.mxu0 0.0
      %422 = vmatprep.subr.mxu0 0.0
      %423 = vmatpush1.msra.mxu0 0.0
      %424 = vmatprep.subr.mxu0 0.0
      %425 = vmatpush1.msra.mxu0 0.0
      %426 = vmatprep.subr.mxu0 0.0
      %427 = vmatpush1.msra.mxu0 0.0
      %428 = vmatprep.subr.mxu0 0.0
      %429 = vmatpush1.msra.mxu0 0.0
      %430 = vmatprep.subr.mxu0 0.0
      %431 = vmatpush1.msra.mxu0 0.0
      %432 = vmatprep.subr.mxu0 0.0
      %433 = vmatpush1.msra.mxu0 0.0
      %434 = vmatprep.mubr.f32.mxu0 0.0
      %435 = vmatmul.mubr.f32.gmra.mrb[0].mxu0 %v355
      %v436 = vpop.f32.mrb[0].mxu0
      %v437 = vadd.f32 %v336, %v436
      %v438 = vpop.f32.mrb[0].mxu0
      %439 = vmatprep.mubr.f32.mxu0 0.0
      %440 = vmatmul.mubr.f32.gmra.mrb[0].mxu0 %v358
      %v441 = vpop.f32.mrb[0].mxu0
      %v442 = vadd.f32 %v341, %v441
      %v443 = vpop.f32.mrb[0].mxu0
      %444 = vmatprep.mubr.f32.mxu0 0.0
      %445 = vmatmul.mubr.f32.gmra.mrb[0].mxu0 %v361
      %v446 = vpop.f32.mrb[0].mxu0
      %v447 = vadd.f32 %v346, %v446
      %v448 = vpop.f32.mrb[0].mxu0
      %449 = vmatprep.mubr.f32.mxu0 0.0
      %450 = vmatmul.mubr.f32.gmra.mrb[0].mxu0 %v364
      %v451 = vpop.f32.mrb[0].mxu0
      %v452 = vadd.f32 %v351, %v451
      %v453 = vpop.f32.mrb[0].mxu0
      %454 = vdwg.mxu0
      %v455 = vmax.f32 %v437, 0.0
      %v456 = vmax.f32 %v442, 0.0
      %v457 = vmax.f32 %v447, 0.0
      %v458 = vmax.f32 %v452, 0.0
      %v459 = vld [vmem:[%s4] sm:$0xff]
      %v460 = vld [vmem:[%s4 + $0x8] sm:$0xff]
      %v461 = vld [vmem:[%s5] sm:$0xff]
      %v462 = vld [vmem:[%s5 + $0x8] sm:$0xff]
      %464 = vset.pattern.permute.xlu0 0
      %465 = vperm.xlu0 %464, %v461
      %v466 = vpop.permute.xlu0 %465
      %469 = vset.pattern.permute.xlu0 0
      %470 = vperm.xlu0 %469, %v462
      %v471 = vpop.permute.xlu0 %470
      %vm473 = vcmask 261120
      %v475 = vsel %vm473, %v459, 0
      %v478 = vsel %vm473, %v460, 0
      %480 = vmatprep.subr.mxu0 0.0
      %481 = vmatpush1.msra.mxu0 %v455
      %482 = vmatprep.subr.mxu0 0.0
      %483 = vmatpush1.msra.mxu0 %v456
      %484 = vmatprep.subr.mxu0 0.0
      %485 = vmatpush1.msra.mxu0 %v457
      %486 = vmatprep.subr.mxu0 0.0
      %487 = vmatpush1.msra.mxu0 %v458
      %488 = vmatprep.subr.mxu0 0.0
      %489 = vmatpush1.msra.mxu0 0.0
      %490 = vmatprep.subr.mxu0 0.0
      %491 = vmatpush1.msra.mxu0 0.0
      %492 = vmatprep.subr.mxu0 0.0
      %493 = vmatpush1.msra.mxu0 0.0
      %494 = vmatprep.subr.mxu0 0.0
      %495 = vmatpush1.msra.mxu0 0.0
      %496 = vmatprep.subr.mxu0 0.0
      %497 = vmatpush1.msra.mxu0 0.0
      %498 = vmatprep.subr.mxu0 0.0
      %499 = vmatpush1.msra.mxu0 0.0
      %500 = vmatprep.subr.mxu0 0.0
      %501 = vmatpush1.msra.mxu0 0.0
      %502 = vmatprep.subr.mxu0 0.0
      %503 = vmatpush1.msra.mxu0 0.0
      %504 = vmatprep.subr.mxu0 0.0
      %505 = vmatpush1.msra.mxu0 0.0
      %506 = vmatprep.subr.mxu0 0.0
      %507 = vmatpush1.msra.mxu0 0.0
      %508 = vmatprep.subr.mxu0 0.0
      %509 = vmatpush1.msra.mxu0 0.0
      %510 = vmatprep.subr.mxu0 0.0
      %511 = vmatpush1.msra.mxu0 0.0
      %512 = vmatprep.subr.mxu0 0.0
      %513 = vmatpush1.msra.mxu0 0.0
      %514 = vmatprep.subr.mxu0 0.0
      %515 = vmatpush1.msra.mxu0 0.0
      %516 = vmatprep.subr.mxu0 0.0
      %517 = vmatpush1.msra.mxu0 0.0
      %518 = vmatprep.subr.mxu0 0.0
      %519 = vmatpush1.msra.mxu0 0.0
      %520 = vmatprep.subr.mxu0 0.0
      %521 = vmatpush1.msra.mxu0 0.0
      %522 = vmatprep.subr.mxu0 0.0
      %523 = vmatpush1.msra.mxu0 0.0
      %524 = vmatprep.subr.mxu0 0.0
      %525 = vmatpush1.msra.mxu0 0.0
      %526 = vmatprep.subr.mxu0 0.0
      %527 = vmatpush1.msra.mxu0 0.0
      %528 = vmatprep.subr.mxu0 0.0
      %529 = vmatpush1.msra.mxu0 0.0
      %530 = vmatprep.subr.mxu0 0.0
      %531 = vmatpush1.msra.mxu0 0.0
      %532 = vmatprep.subr.mxu0 0.0
      %533 = vmatpush1.msra.mxu0 0.0
      %534 = vmatprep.subr.mxu0 0.0
      %535 = vmatpush1.msra.mxu0 0.0
      %536 = vmatprep.subr.mxu0 0.0
      %537 = vmatpush1.msra.mxu0 0.0
      %538 = vmatprep.subr.mxu0 0.0
      %539 = vmatpush1.msra.mxu0 0.0
      %540 = vmatprep.subr.mxu0 0.0
      %541 = vmatpush1.msra.mxu0 0.0
      %542 = vmatprep.subr.mxu0 0.0
      %543 = vmatpush1.msra.mxu0 0.0
      %544 = vmatprep.mubr.f32.mxu0 0.0
      %545 = vmatmul.mubr.f32.gmra.mrb[0].mxu0 %v475
      %v546 = vpop.f32.mrb[0].mxu0
      %v547 = vadd.f32 %v466, %v546
      %v548 = vpop.f32.mrb[0].mxu0
      %549 = vmatprep.mubr.f32.mxu0 0.0
      %550 = vmatmul.mubr.f32.gmra.mrb[0].mxu0 %v478
      %v551 = vpop.f32.mrb[0].mxu0
      %v552 = vadd.f32 %v471, %v551
      %v553 = vpop.f32.mrb[0].mxu0
      %554 = vdwg.mxu0
      %v555 = vmax.f32 %v547, 0.0
      %v556 = vmax.f32 %v552, 0.0
      %v557 = vld [vmem:[%s6] sm:$0xff]
      %v558 = vld [vmem:[%s6 + $0x8] sm:$0xff]
      %560 = vset.pattern.permute.xlu0 0
      %561 = vperm.xlu0 %560, %v557
      %v562 = vpop.permute.xlu0 %561
      %565 = vset.pattern.permute.xlu0 0
      %566 = vperm.xlu0 %565, %v558
      %v567 = vpop.permute.xlu0 %566
      %v569 = vmul.f32 %v555, %v562
      %v570 = vmul.f32 %v556, %v567
      %v571 = vadd.f32 %v569, %v570
      %v572 = vrot.slane %v571, 4
      %v573 = vadd.f32 %v571, %v572
      %v574 = vrot.slane %v573, 2
      %v575 = vadd.f32 %v573, %v574
      %v576 = vrot.slane %v575, 1
      %v577 = vadd.f32 %v575, %v576
      %s578 = sld [smem:[#allocation3]]
      %v579 = vstv %s578
      %v580 = vadd.f32 %v577, %v579
      %v581 = vsub.f32 0.0, %v580
      %v582 = vmul.f32 %v581, 1.442695
      %v583 = vpow.pop %v582
      %584 = vst [vmem:[%s316] sm:$0x1] %v583
      %p585 = scmp.lt.s32.totalorder %s20, 1
      %s586 = scalar_select %p585, %s20, 1
      %s587 = scalar_lea.vmem %s8, %s586
      // Predicated region
      $region53: #{_forward_deltas.1} parent=51 // pred_check
        %p588 = pneg %p216
      $region54: #{_forward_deltas.1} parent=51 // pred_check_branch
        %590 = sbr.rel (%p588) target = $region56
      $region55: #{_forward_deltas.1} parent=51 // pred_region
        _
      $region56: #{_forward_deltas.1} parent=51 // pred_fallthru
        _
    $region52: #{_forward_deltas.1} parent=5 // pred_fallthru
      _
    %p591 = scmp.le.s32.totalorder 2, %s15
    // Predicated region
    $region57: #{_forward_deltas.1} parent=5 // pred_check
      %p592 = pneg %p591
    $region58: #{_forward_deltas.1} parent=5 // pred_check_branch
      %594 = sbr.rel (%p592) target = $region60
    $region59: #{_forward_deltas.1} parent=5 // pred_region
      %s595 = ssub.s32 %s15, 2
      // Predicated region
      $region61: #{_forward_deltas.1} parent=59 // pred_check
        %p596 = pneg %p222
      $region62: #{_forward_deltas.1} parent=59 // pred_check_branch
        %598 = sbr.rel (%p596) target = $region64
      $region63: #{_forward_deltas.1} parent=59 // pred_region
        %p599 = scmp.lt.s32.totalorder %s21, 1
        %s600 = scalar_select %p599, %s21, 1
        %s601 = scalar_lea.vmem %s8, %s600
      $region64: #{_forward_deltas.1} parent=59 // pred_fallthru
        _
    $region60: #{_forward_deltas.1} parent=5 // pred_fallthru
      _
  $region6: #{_forward_deltas.1} parent=0 // loop_footer
    %s19 = sadd.s32 1, %s15
  $region7: #{_forward_deltas.1} parent=0 // loop_footer_branch
    %14 = sbr.rel target = $region3
  $region8: #{_forward_deltas.1} parent=0 // loop_exit
    _

</llo_original>
